<compile_context>
chip_gen: v5e
topology: v5e:2x2
jax: 0.10.0
libtpu: 0.0.40
codegen_flags: <defaults>
</compile_context>

<pallas_src>
import numpy as np
import jax
import jax.numpy as jnp
from jax.experimental import pallas as pl
from jax.experimental.pallas import tpu as pltpu

# cfg.TRAIN thresholds used by the original PCL code.
FG_THRESH = 0.5
BG_THRESH = 0.1

# NT matmul dimension numbers (contract last dim of both operands), as used by
# the official Pallas TPU flash-attention kernel.
_NT_DIMS = (((1,), (1,)), ((), ()))


def _pcl_loss_kernel(boxes_t_ref, gt_b_ref, prob_t_ref, gt_lab_ref, gt_sc_ref, out_ref):
    eps = 1e-9
    prob = jnp.clip(prob_t_ref[...], eps, 1.0 - eps)           # (C, R) lane-dense
    C, R = prob.shape
    G = gt_b_ref.shape[0]

    # --- pairwise IoU (bbox_overlaps, +1 "Caffe" area convention) ---
    # proposal coords as (1, R) rows, gt coords as (G, 1) columns -> (G, R) grids.
    bx1 = boxes_t_ref[0:1, :]; by1 = boxes_t_ref[1:2, :]       # (1, R)
    bx2 = boxes_t_ref[2:3, :]; by2 = boxes_t_ref[3:4, :]
    gx1 = gt_b_ref[:, 0:1]; gy1 = gt_b_ref[:, 1:2]             # (G, 1)
    gx2 = gt_b_ref[:, 2:3]; gy2 = gt_b_ref[:, 3:4]

    area_b = (bx2 - bx1 + 1.0) * (by2 - by1 + 1.0)             # (1, R)
    area_g = (gx2 - gx1 + 1.0) * (gy2 - gy1 + 1.0)             # (G, 1)

    iw = jnp.minimum(bx2, gx2) - jnp.maximum(bx1, gx1) + 1.0   # (G, R)
    ih = jnp.minimum(by2, gy2) - jnp.maximum(by1, gy1) + 1.0
    valid = (iw > 0.0) & (ih > 0.0)
    inter = jnp.maximum(iw, 0.0) * jnp.maximum(ih, 0.0)
    ua = area_b + area_g - inter                               # > 0 for valid boxes
    overlaps = jnp.where(valid, inter / ua, 0.0)               # (G, R)

    # --- argmax assignment over G (first max, like np.argmax) via min-index trick ---
    max_ov = jnp.max(overlaps, axis=0, keepdims=True)          # (1, R)
    row = jax.lax.broadcasted_iota(jnp.int32, (G, R), 0)       # (G, R)
    idx_cand = jnp.where(overlaps >= max_ov, row, G)
    assign_idx = jnp.min(idx_cand, axis=0, keepdims=True)      # (1, R)
    assign_onehot = (row == assign_idx).astype(jnp.float32)    # (G, R)

    gt_lab_f = gt_lab_ref[...].astype(jnp.float32)             # (G, 1)
    gt_sc = gt_sc_ref[...]                                     # (G, 1)

    # gather gt label / score per proposal via one-hot mask (sublane reduce over G)
    labels_g = jnp.sum(assign_onehot * gt_lab_f, axis=0, keepdims=True)  # (1, R)
    scores_g = jnp.sum(assign_onehot * gt_sc, axis=0, keepdims=True)     # (1, R)

    fg = (max_ov >= FG_THRESH).astype(jnp.float32)             # (1, R)
    not_ig = (max_ov >= BG_THRESH).astype(jnp.float32)         # (1, R)

    labels = labels_g * fg          # background proposals get label 0
    weights = scores_g * not_ig     # ignored proposals get weight 0

    # --- foreground (per-gt cluster) loss ---
    p_mask = assign_onehot * fg                                # (G, R)
    p_count = jnp.sum(p_mask, axis=1, keepdims=True)           # (G, 1)

    # MXU contraction over the big dim R:  M[g, c] = sum_r p_mask[g, r] * prob[c, r]
    M = jax.lax.dot_general(p_mask, prob, dimension_numbers=_NT_DIMS,
                            preferred_element_type=jnp.float32)          # (G, C)

    # select prob mass of each cluster's own class via a tiny (G, C) one-hot
    cls_iota = jax.lax.broadcasted_iota(jnp.int32, (G, C), 1)            # (G, C)
    onehot_gc = (cls_iota == gt_lab_ref[...]).astype(jnp.float32)        # (G, C)
    p_sum = jnp.sum(onehot_gc * M, axis=1, keepdims=True)                # (G, 1)

    mean_prob = p_sum / jnp.maximum(p_count, 1.0)
    fg_terms = jnp.where(
        p_count > 0.0,
        -jnp.log(jnp.maximum(mean_prob, eps)) * p_count * gt_sc,
        0.0,
    )
    loss_fg = jnp.sum(fg_terms, keepdims=True)                 # (1, 1)

    # --- background loss (lane-dense (1, R) row of class-0 probs) ---
    n_mask = jnp.where(labels == 0.0, weights, 0.0)            # (1, R)
    loss_bg = -jnp.sum(jnp.log(prob[0:1, :]) * n_mask, keepdims=True)    # (1, 1)

    out_ref[...] = (loss_fg + loss_bg) / jnp.float32(R)


@jax.jit
def pcl_losses_pallas(boxes, im_labels, cls_prob_new, gt_boxes, gt_classes, gt_scores):
    """Pallas equivalent of PCL_Losses.forward (batch size must be 1)."""
    assert im_labels.shape[0] == 1, "batch size should be equal to 1"
    R, C = cls_prob_new.shape
    G = gt_boxes.shape[0]

    # Single full-block invocation: inputs + (G,R)/(C,R) temps stay well under a
    # few MiB even at production sizes (R~4k, C~21, G~tens); no grid needed.
    assert R * (C + 4 + 4 * G) * 4 < (8 << 20), "PCL loss buffers exceed VMEM budget"

    boxes_t = jnp.asarray(boxes, jnp.float32).T                # (4, R)
    gt_b = jnp.asarray(gt_boxes, jnp.float32)                  # (G, 4)
    prob_t = jnp.asarray(cls_prob_new, jnp.float32).T          # (C, R)
    gt_lab = jnp.asarray(gt_classes, jnp.int32).reshape(G, 1)
    gt_sc = jnp.asarray(gt_scores, jnp.float32).reshape(G, 1)

    vmem = pl.BlockSpec(memory_space=pltpu.MemorySpace.VMEM)
    out = pl.pallas_call(
        _pcl_loss_kernel,
        out_shape=jax.ShapeDtypeStruct((1, 1), jnp.float32),
        in_specs=[vmem] * 5,
        out_specs=vmem,
    )(boxes_t, gt_b, prob_t, gt_lab, gt_sc)
    # Note (v7x): if many images are processed per step, batch them with a
    # leading grid axis + dimension_semantics=("parallel",) to use both TCs.
    return out[0, 0]


# ---------------- pure-numpy reference (mirrors the PyTorch forward) -------------
def pcl_losses_ref(boxes, im_labels, cls_prob_new, gt_boxes, gt_classes, gt_scores):
    eps = 1e-9
    prob = np.clip(np.asarray(cls_prob_new, np.float64), eps, 1 - eps)
    boxes = np.asarray(boxes, np.float64)
    gt_boxes = np.asarray(gt_boxes, np.float64)
    R, G = boxes.shape[0], gt_boxes.shape[0]

    area_b = (boxes[:, 2] - boxes[:, 0] + 1) * (boxes[:, 3] - boxes[:, 1] + 1)
    area_g = (gt_boxes[:, 2] - gt_boxes[:, 0] + 1) * (gt_boxes[:, 3] - gt_boxes[:, 1] + 1)
    overlaps = np.zeros((R, G))
    for i in range(G):
        iw = np.minimum(boxes[:, 2], gt_boxes[i, 2]) - np.maximum(boxes[:, 0], gt_boxes[i, 0]) + 1
        ih = np.minimum(boxes[:, 3], gt_boxes[i, 3]) - np.maximum(boxes[:, 1], gt_boxes[i, 1]) + 1
        valid = (iw > 0) & (ih > 0)
        ua = area_b + area_g[i] - iw * ih
        overlaps[:, i] = np.where(valid, iw * ih / ua, 0.0)

    gt_labels = np.asarray(gt_classes).astype(np.int64)
    gt_sc = np.asarray(gt_scores, np.float64)
    gt_assignment = overlaps.argmax(axis=1)
    max_overlaps = overlaps.max(axis=1)
    labels = gt_labels[gt_assignment, 0].copy()
    cls_loss_weights = gt_sc[gt_assignment, 0].copy()
    bg_inds = np.where(max_overlaps < FG_THRESH)[0]
    labels[bg_inds] = 0
    ga = gt_assignment.copy()
    ga[bg_inds] = -1
    ig_inds = np.where(max_overlaps < BG_THRESH)[0]
    cls_loss_weights[ig_inds] = 0.0

    loss = 0.0
    for i in range(G):
        p_mask = (ga == i).astype(np.float64)
        p_count = p_mask.sum()
        if p_count > 0:
            mean_prob = np.sum(prob[:, gt_labels[i, 0]] * p_mask) / p_count
            loss = loss - np.log(mean_prob) * p_count * gt_sc[i, 0]
    n_mask = np.where(labels == 0, cls_loss_weights, 0.0)
    loss = loss - np.sum(np.log(prob[:, 0]) * n_mask)
    return loss / R


if __name__ == "__main__":
    key = jax.random.PRNGKey(0)
    R, C, G = 64, 16, 8      # proposals, classes (0 = bg), gt boxes
    IMG = 256.0

    k1, k2, k3, k4, k5, k6, k7, k8 = jax.random.split(key, 8)

    # proposal boxes
    bxy = jax.random.uniform(k1, (R, 2), minval=0.0, maxval=IMG - 80.0)
    bwh = jax.random.uniform(k2, (R, 2), minval=10.0, maxval=70.0)
    boxes = jnp.concatenate([bxy, bxy + bwh], axis=1)                     # (R, 4)

    # ground-truth boxes
    gxy = jax.random.uniform(k3, (G, 2), minval=0.0, maxval=IMG - 80.0)
    gwh = jax.random.uniform(k4, (G, 2), minval=10.0, maxval=70.0)
    gt_boxes = jnp.concatenate([gxy, gxy + gwh], axis=1)                  # (G, 4)

    cls_prob_new = jax.nn.softmax(jax.random.normal(k5, (R, C)), axis=-1)  # (R, C)
    im_labels = (jax.random.uniform(k6, (1, C)) > 0.5).astype(jnp.float32)
    gt_classes = jax.random.randint(k7, (G, 1), 1, C)                     # labels in [1, C)
    gt_scores = jax.random.uniform(k8, (G, 1), minval=0.1, maxval=1.0)

    loss = pcl_losses_pallas(boxes, im_labels, cls_prob_new, gt_boxes, gt_classes, gt_scores)
    loss = jax.block_until_ready(loss)

    ref = pcl_losses_ref(np.asarray(boxes), np.asarray(im_labels), np.asarray(cls_prob_new),
                         np.asarray(gt_boxes), np.asarray(gt_classes), np.asarray(gt_scores))
    np.testing.assert_allclose(float(loss), float(ref), rtol=1e-3, atol=1e-3)
    print("KERNEL_OK")
</pallas_src>

<mosaic_0001>
module attributes {stable_mosaic.version = 11 : i64} {
  func.func @_pcl_loss_kernel(%arg0: memref<4x64xf32, #tpu.memory_space<vmem>>, %arg1: memref<8x4xf32, #tpu.memory_space<vmem>>, %arg2: memref<16x64xf32, #tpu.memory_space<vmem>>, %arg3: memref<8x1xi32, #tpu.memory_space<vmem>>, %arg4: memref<8x1xf32, #tpu.memory_space<vmem>>, %arg5: memref<1x1xf32, #tpu.memory_space<vmem>>) attributes {dimension_semantics = [], scalar_prefetch = 0 : i64, scratch_operands = 0 : i64, tpu.core_type = #tpu.core_type<tc>} {
    %c0 = arith.constant 0 : index
    %c0_0 = arith.constant 0 : index
    %0 = vector.load %arg2[%c0, %c0_0] : memref<16x64xf32, #tpu.memory_space<vmem>>, vector<16x64xf32>
    %cst = arith.constant 9.99999971E-10 : f32
    %cst_1 = arith.constant 1.000000e+00 : f32
    %1 = vector.broadcast %cst : f32 to vector<16x64xf32>
    %2 = arith.maximumf %1, %0 : vector<16x64xf32>
    %3 = vector.broadcast %cst_1 : f32 to vector<16x64xf32>
    %4 = arith.minimumf %3, %2 : vector<16x64xf32>
    %c0_2 = arith.constant 0 : index
    %c0_3 = arith.constant 0 : index
    %5 = vector.load %arg0[%c0_2, %c0_3] : memref<4x64xf32, #tpu.memory_space<vmem>>, vector<1x64xf32>
    %c1 = arith.constant 1 : index
    %c0_4 = arith.constant 0 : index
    %6 = vector.load %arg0[%c1, %c0_4] : memref<4x64xf32, #tpu.memory_space<vmem>>, vector<1x64xf32>
    %c2 = arith.constant 2 : index
    %c0_5 = arith.constant 0 : index
    %7 = vector.load %arg0[%c2, %c0_5] : memref<4x64xf32, #tpu.memory_space<vmem>>, vector<1x64xf32>
    %c3 = arith.constant 3 : index
    %c0_6 = arith.constant 0 : index
    %8 = vector.load %arg0[%c3, %c0_6] : memref<4x64xf32, #tpu.memory_space<vmem>>, vector<1x64xf32>
    %c0_7 = arith.constant 0 : index
    %c0_8 = arith.constant 0 : index
    %9 = vector.load %arg1[%c0_7, %c0_8] : memref<8x4xf32, #tpu.memory_space<vmem>>, vector<8x1xf32>
    %c0_9 = arith.constant 0 : index
    %c1_10 = arith.constant 1 : index
    %10 = vector.load %arg1[%c0_9, %c1_10] : memref<8x4xf32, #tpu.memory_space<vmem>>, vector<8x1xf32>
    %c0_11 = arith.constant 0 : index
    %c2_12 = arith.constant 2 : index
    %11 = vector.load %arg1[%c0_11, %c2_12] : memref<8x4xf32, #tpu.memory_space<vmem>>, vector<8x1xf32>
    %c0_13 = arith.constant 0 : index
    %c3_14 = arith.constant 3 : index
    %12 = vector.load %arg1[%c0_13, %c3_14] : memref<8x4xf32, #tpu.memory_space<vmem>>, vector<8x1xf32>
    %13 = arith.subf %7, %5 : vector<1x64xf32>
    %cst_15 = arith.constant 1.000000e+00 : f32
    %14 = vector.broadcast %cst_15 : f32 to vector<1x64xf32>
    %15 = arith.addf %13, %14 : vector<1x64xf32>
    %16 = arith.subf %8, %6 : vector<1x64xf32>
    %cst_16 = arith.constant 1.000000e+00 : f32
    %17 = vector.broadcast %cst_16 : f32 to vector<1x64xf32>
    %18 = arith.addf %16, %17 : vector<1x64xf32>
    %19 = arith.mulf %15, %18 : vector<1x64xf32>
    %20 = arith.subf %11, %9 : vector<8x1xf32>
    %cst_17 = arith.constant 1.000000e+00 : f32
    %21 = vector.broadcast %cst_17 : f32 to vector<8x1xf32>
    %22 = arith.addf %20, %21 : vector<8x1xf32>
    %23 = arith.subf %12, %10 : vector<8x1xf32>
    %cst_18 = arith.constant 1.000000e+00 : f32
    %24 = vector.broadcast %cst_18 : f32 to vector<8x1xf32>
    %25 = arith.addf %23, %24 : vector<8x1xf32>
    %26 = arith.mulf %22, %25 : vector<8x1xf32>
    %27 = vector.broadcast %7 : vector<1x64xf32> to vector<8x64xf32>
    %28 = vector.broadcast %11 : vector<8x1xf32> to vector<8x64xf32>
    %29 = arith.minimumf %27, %28 : vector<8x64xf32>
    %30 = vector.broadcast %5 : vector<1x64xf32> to vector<8x64xf32>
    %31 = vector.broadcast %9 : vector<8x1xf32> to vector<8x64xf32>
    %32 = arith.maximumf %30, %31 : vector<8x64xf32>
    %33 = arith.subf %29, %32 : vector<8x64xf32>
    %cst_19 = arith.constant 1.000000e+00 : f32
    %34 = vector.broadcast %cst_19 : f32 to vector<8x64xf32>
    %35 = arith.addf %33, %34 : vector<8x64xf32>
    %36 = vector.broadcast %8 : vector<1x64xf32> to vector<8x64xf32>
    %37 = vector.broadcast %12 : vector<8x1xf32> to vector<8x64xf32>
    %38 = arith.minimumf %36, %37 : vector<8x64xf32>
    %39 = vector.broadcast %6 : vector<1x64xf32> to vector<8x64xf32>
    %40 = vector.broadcast %10 : vector<8x1xf32> to vector<8x64xf32>
    %41 = arith.maximumf %39, %40 : vector<8x64xf32>
    %42 = arith.subf %38, %41 : vector<8x64xf32>
    %cst_20 = arith.constant 1.000000e+00 : f32
    %43 = vector.broadcast %cst_20 : f32 to vector<8x64xf32>
    %44 = arith.addf %42, %43 : vector<8x64xf32>
    %cst_21 = arith.constant 0.000000e+00 : f32
    %45 = vector.broadcast %cst_21 : f32 to vector<8x64xf32>
    %46 = arith.cmpf ogt, %35, %45 : vector<8x64xf32>
    %cst_22 = arith.constant 0.000000e+00 : f32
    %47 = vector.broadcast %cst_22 : f32 to vector<8x64xf32>
    %48 = arith.cmpf ogt, %44, %47 : vector<8x64xf32>
    %49 = arith.andi %46, %48 : vector<8x64xi1>
    %cst_23 = arith.constant 0.000000e+00 : f32
    %50 = vector.broadcast %cst_23 : f32 to vector<8x64xf32>
    %51 = arith.maximumf %35, %50 : vector<8x64xf32>
    %cst_24 = arith.constant 0.000000e+00 : f32
    %52 = vector.broadcast %cst_24 : f32 to vector<8x64xf32>
    %53 = arith.maximumf %44, %52 : vector<8x64xf32>
    %54 = arith.mulf %51, %53 : vector<8x64xf32>
    %55 = vector.broadcast %19 : vector<1x64xf32> to vector<8x64xf32>
    %56 = vector.broadcast %26 : vector<8x1xf32> to vector<8x64xf32>
    %57 = arith.addf %55, %56 : vector<8x64xf32>
    %58 = arith.subf %57, %54 : vector<8x64xf32>
    %59 = arith.divf %54, %58 : vector<8x64xf32>
    %cst_25 = arith.constant 0.000000e+00 : f32
    %60 = vector.broadcast %cst_25 : f32 to vector<8x64xf32>
    %61 = arith.select %49, %59, %60 : vector<8x64xi1>, vector<8x64xf32>
    %cst_26 = arith.constant dense<0xFF800000> : vector<64xf32>
    %62 = vector.multi_reduction <maximumf>, %61, %cst_26 [0] : vector<8x64xf32> to vector<64xf32>
    %63 = vector.shape_cast %62 : vector<64xf32> to vector<1x64xf32>
    %64 = tpu.iota {dimensions = array<i32: 0>} : vector<8x64xi32>
    %65 = vector.broadcast %63 : vector<1x64xf32> to vector<8x64xf32>
    %66 = arith.cmpf oge, %61, %65 : vector<8x64xf32>
    %c8_i32 = arith.constant 8 : i32
    %67 = vector.broadcast %c8_i32 : i32 to vector<8x64xi32>
    %68 = arith.select %66, %64, %67 : vector<8x64xi1>, vector<8x64xi32>
    %cst_27 = arith.constant dense<2147483647> : vector<64xi32>
    %69 = vector.multi_reduction <minsi>, %68, %cst_27 [0] : vector<8x64xi32> to vector<64xi32>
    %70 = vector.shape_cast %69 : vector<64xi32> to vector<1x64xi32>
    %71 = vector.broadcast %70 : vector<1x64xi32> to vector<8x64xi32>
    %72 = arith.cmpi eq, %64, %71 : vector<8x64xi32>
    %73 = arith.extui %72 : vector<8x64xi1> to vector<8x64xi32>
    %74 = arith.sitofp %73 : vector<8x64xi32> to vector<8x64xf32>
    %c0_28 = arith.constant 0 : index
    %c0_29 = arith.constant 0 : index
    %75 = vector.load %arg3[%c0_28, %c0_29] : memref<8x1xi32, #tpu.memory_space<vmem>>, vector<8x1xi32>
    %76 = arith.sitofp %75 : vector<8x1xi32> to vector<8x1xf32>
    %c0_30 = arith.constant 0 : index
    %c0_31 = arith.constant 0 : index
    %77 = vector.load %arg4[%c0_30, %c0_31] : memref<8x1xf32, #tpu.memory_space<vmem>>, vector<8x1xf32>
    %78 = vector.broadcast %76 : vector<8x1xf32> to vector<8x64xf32>
    %79 = arith.mulf %74, %78 : vector<8x64xf32>
    %cst_32 = arith.constant dense<0.000000e+00> : vector<64xf32>
    %80 = vector.multi_reduction <add>, %79, %cst_32 [0] : vector<8x64xf32> to vector<64xf32>
    %81 = vector.shape_cast %80 : vector<64xf32> to vector<1x64xf32>
    %82 = vector.broadcast %77 : vector<8x1xf32> to vector<8x64xf32>
    %83 = arith.mulf %74, %82 : vector<8x64xf32>
    %cst_33 = arith.constant dense<0.000000e+00> : vector<64xf32>
    %84 = vector.multi_reduction <add>, %83, %cst_33 [0] : vector<8x64xf32> to vector<64xf32>
    %85 = vector.shape_cast %84 : vector<64xf32> to vector<1x64xf32>
    %cst_34 = arith.constant 5.000000e-01 : f32
    %86 = vector.broadcast %cst_34 : f32 to vector<1x64xf32>
    %87 = arith.cmpf oge, %63, %86 : vector<1x64xf32>
    %88 = arith.extui %87 : vector<1x64xi1> to vector<1x64xi32>
    %89 = arith.sitofp %88 : vector<1x64xi32> to vector<1x64xf32>
    %cst_35 = arith.constant 1.000000e-01 : f32
    %90 = vector.broadcast %cst_35 : f32 to vector<1x64xf32>
    %91 = arith.cmpf oge, %63, %90 : vector<1x64xf32>
    %92 = arith.extui %91 : vector<1x64xi1> to vector<1x64xi32>
    %93 = arith.sitofp %92 : vector<1x64xi32> to vector<1x64xf32>
    %94 = arith.mulf %81, %89 : vector<1x64xf32>
    %95 = arith.mulf %85, %93 : vector<1x64xf32>
    %96 = vector.broadcast %89 : vector<1x64xf32> to vector<8x64xf32>
    %97 = arith.mulf %74, %96 : vector<8x64xf32>
    %cst_36 = arith.constant dense<0.000000e+00> : vector<8xf32>
    %98 = vector.multi_reduction <add>, %97, %cst_36 [1] : vector<8x64xf32> to vector<8xf32>
    %99 = vector.shape_cast %98 : vector<8xf32> to vector<8x1xf32>
    %cst_37 = arith.constant dense<0.000000e+00> : vector<8x16xf32>
    %100 = tpu.matmul %97, %4, %cst_37 {dimension_numbers = #tpu.dot_dimension_numbers<[1], [1], [0], [0], [0, 0, 1, 0], [], []>} : vector<8x64xf32>, vector<16x64xf32>, vector<8x16xf32> -> vector<8x16xf32>
    %101 = tpu.iota {dimensions = array<i32: 1>} : vector<8x16xi32>
    %c0_38 = arith.constant 0 : index
    %c0_39 = arith.constant 0 : index
    %102 = vector.load %arg3[%c0_38, %c0_39] : memref<8x1xi32, #tpu.memory_space<vmem>>, vector<8x1xi32>
    %103 = vector.broadcast %102 : vector<8x1xi32> to vector<8x16xi32>
    %104 = arith.cmpi eq, %101, %103 : vector<8x16xi32>
    %105 = arith.extui %104 : vector<8x16xi1> to vector<8x16xi32>
    %106 = arith.sitofp %105 : vector<8x16xi32> to vector<8x16xf32>
    %107 = arith.mulf %106, %100 : vector<8x16xf32>
    %cst_40 = arith.constant dense<0.000000e+00> : vector<8xf32>
    %108 = vector.multi_reduction <add>, %107, %cst_40 [1] : vector<8x16xf32> to vector<8xf32>
    %109 = vector.shape_cast %108 : vector<8xf32> to vector<8x1xf32>
    %cst_41 = arith.constant 1.000000e+00 : f32
    %110 = vector.broadcast %cst_41 : f32 to vector<8x1xf32>
    %111 = arith.maximumf %99, %110 : vector<8x1xf32>
    %112 = arith.divf %109, %111 : vector<8x1xf32>
    %cst_42 = arith.constant 0.000000e+00 : f32
    %113 = vector.broadcast %cst_42 : f32 to vector<8x1xf32>
    %114 = arith.cmpf ogt, %99, %113 : vector<8x1xf32>
    %cst_43 = arith.constant 9.99999971E-10 : f32
    %115 = vector.broadcast %cst_43 : f32 to vector<8x1xf32>
    %116 = arith.maximumf %112, %115 : vector<8x1xf32>
    %117 = math.log %116 : vector<8x1xf32>
    %cst_44 = arith.constant 0.000000e+00 : f32
    %118 = vector.broadcast %cst_44 : f32 to vector<8x1xf32>
    %119 = arith.subf %118, %117 : vector<8x1xf32>
    %120 = arith.mulf %119, %99 : vector<8x1xf32>
    %121 = arith.mulf %120, %77 : vector<8x1xf32>
    %cst_45 = arith.constant 0.000000e+00 : f32
    %122 = vector.broadcast %cst_45 : f32 to vector<8x1xf32>
    %123 = arith.select %114, %121, %122 : vector<8x1xi1>, vector<8x1xf32>
    %124 = vector.shape_cast %123 : vector<8x1xf32> to vector<1x8x1xf32>
    %cst_46 = arith.constant dense<0.000000e+00> : vector<1xf32>
    %125 = vector.multi_reduction <add>, %124, %cst_46 [1, 2] : vector<1x8x1xf32> to vector<1xf32>
    %126 = vector.shape_cast %125 : vector<1xf32> to vector<1x1x1xf32>
    %127 = vector.extract %126[0, 0, 0] : f32 from vector<1x1x1xf32>
    %128 = vector.broadcast %127 : f32 to vector<1x1xf32>
    %cst_47 = arith.constant 0.000000e+00 : f32
    %129 = vector.broadcast %cst_47 : f32 to vector<1x64xf32>
    %130 = arith.cmpf oeq, %94, %129 : vector<1x64xf32>
    %cst_48 = arith.constant 0.000000e+00 : f32
    %131 = vector.broadcast %cst_48 : f32 to vector<1x64xf32>
    %132 = arith.select %130, %95, %131 : vector<1x64xi1>, vector<1x64xf32>
    %133 = vector.extract_strided_slice %4 {offsets = [0, 0], sizes = [1, 64], strides = [1, 1]} : vector<16x64xf32> to vector<1x64xf32>
    %134 = math.log %133 : vector<1x64xf32>
    %135 = arith.mulf %134, %132 : vector<1x64xf32>
    %136 = vector.shape_cast %135 : vector<1x64xf32> to vector<1x1x64xf32>
    %cst_49 = arith.constant dense<0.000000e+00> : vector<1xf32>
    %137 = vector.multi_reduction <add>, %136, %cst_49 [1, 2] : vector<1x1x64xf32> to vector<1xf32>
    %138 = vector.shape_cast %137 : vector<1xf32> to vector<1x1x1xf32>
    %139 = vector.extract %138[0, 0, 0] : f32 from vector<1x1x1xf32>
    %140 = vector.broadcast %139 : f32 to vector<1x1xf32>
    %cst_50 = arith.constant 0.000000e+00 : f32
    %141 = vector.broadcast %cst_50 : f32 to vector<1x1xf32>
    %142 = arith.subf %141, %140 : vector<1x1xf32>
    %143 = arith.addf %128, %142 : vector<1x1xf32>
    %cst_51 = arith.constant 6.400000e+01 : f32
    %144 = vector.broadcast %cst_51 : f32 to vector<1x1xf32>
    %145 = arith.divf %143, %144 : vector<1x1xf32>
    %c0_52 = arith.constant 0 : index
    %c0_53 = arith.constant 0 : index
    %146 = vector.load %arg5[%c0_52, %c0_53] : memref<1x1xf32, #tpu.memory_space<vmem>>, vector<1x1xf32>
    tpu.vector_store %arg5[%c0_52, %c0_53], %145 {strides = array<i32>} : memref<1x1xf32, #tpu.memory_space<vmem>>, vector<1x1xf32>,
    return
  }
}

</mosaic_0001>

<llo_original>
// kernel: pcl_losses_pallas.1
$region0: #{pcl_losses_pallas.1}
  #allocation0 [shape = 'u32[]', space=smem, size = 0x4, offset = 0x4, fixed_abs, tag = 'smem constant byte address 0x4 - core index']
  #allocation1 [shape = 'u32[72,128]{1,0:T(1,128)}', space=vmem, size = 0x9000, scoped, tag = 'internal scratch']
  %s0 = inlined_call_operand.vmem [shape: f32[4,64], index: 0, kind: input, shape index: {}]
  %s1 = inlined_call_operand.vmem [shape: f32[8,4], index: 1, kind: input, shape index: {}]
  %s2 = inlined_call_operand.vmem [shape: f32[16,64], index: 2, kind: input, shape index: {}]
  %s3 = inlined_call_operand.vmem [shape: s32[8,1], index: 3, kind: input, shape index: {}]
  %s4 = inlined_call_operand.vmem [shape: f32[8,1], index: 4, kind: input, shape index: {}]
  %s5 = inlined_call_operand.hbm [shape: f32[1,1], index: 5, kind: output, shape index: {}]
  %s6 = sld [smem:[#allocation0]]
  $region30: #{pcl_losses_pallas.1} parent=0
    _
  %s8 = ssub.s32 1, %s6
  %s9 = scalar_select 0, %s8, %s6
  $region1: #{pcl_losses_pallas.1} parent=0
    #allocation2 [shape = 'u8[512]{0}', space=vmem, size = 0x400, scoped, tag = 'output window, operand 0, single buffered']
    #allocation3 [shape = 's32[1]{0}', space=sflag, size = 0x4, scoped, tag = 'scoped memory for pcl_losses_pallas.1']
    %10 = vsyncpa [#allocation3], 0
    // Predicated region
    $region2: #{pcl_losses_pallas.1} parent=1 // pred_check
      _
    $region3: #{pcl_losses_pallas.1} parent=1 // pred_check_branch
      %12 = sbr.rel (0) target = $region5
    $region4: #{pcl_losses_pallas.1} parent=1 // pred_region
      _
    $region5: #{pcl_losses_pallas.1} parent=1 // pred_fallthru
      _
    // Predicated region
    $region6: #{pcl_losses_pallas.1} parent=1 // pred_check
      _
    $region7: #{pcl_losses_pallas.1} parent=1 // pred_check_branch
      %14 = sbr.rel (0) target = $region9
    $region8: #{pcl_losses_pallas.1} parent=1 // pred_region
      _
    $region9: #{pcl_losses_pallas.1} parent=1 // pred_fallthru
      _
    // Predicated region
    $region10: #{pcl_losses_pallas.1} parent=1 // pred_check
      _
    $region11: #{pcl_losses_pallas.1} parent=1 // pred_check_branch
      %16 = sbr.rel (0) target = $region13
    $region12: #{pcl_losses_pallas.1} parent=1 // pred_region
      _
    $region13: #{pcl_losses_pallas.1} parent=1 // pred_fallthru
      _
    // Predicated region
    $region14: #{pcl_losses_pallas.1} parent=1 // pred_check
      _
    $region15: #{pcl_losses_pallas.1} parent=1 // pred_check_branch
      %18 = sbr.rel (0) target = $region17
    $region16: #{pcl_losses_pallas.1} parent=1 // pred_region
      _
    $region17: #{pcl_losses_pallas.1} parent=1 // pred_fallthru
      _
    // Predicated region
    $region18: #{pcl_losses_pallas.1} parent=1 // pred_check
      _
    $region19: #{pcl_losses_pallas.1} parent=1 // pred_check_branch
      %20 = sbr.rel (0) target = $region21
    $region20: #{pcl_losses_pallas.1} parent=1 // pred_region
      _
    $region21: #{pcl_losses_pallas.1} parent=1 // pred_fallthru
      _
    %v21 = vld [vmem:[%s2] sm:$0xff]
    %v22 = vld [vmem:[%s2 + $0x8] sm:$0xff]
    %v23 = vmax.f32 %v21, 1e-09
    %v24 = vmax.f32 %v22, 1e-09
    %v25 = vmin.f32 %v23, 1.0
    %v26 = vmin.f32 %v24, 1.0
    %v27 = vld [vmem:[%s0] sm:$0x1]
    %v28 = vld [vmem:[%s0 + $0x1] sm:$0x1]
    %v29 = vld [vmem:[%s0 + $0x2] sm:$0x1]
    %v30 = vld [vmem:[%s0 + $0x3] sm:$0x1]
    %v31 = vld [vmem:[%s1] sm:$0xff]
    %v32 = vsub.f32 %v29, %v27
    %v33 = vadd.f32 %v32, 1.0
    %v34 = vsub.f32 %v30, %v28
    %v35 = vadd.f32 %v34, 1.0
    %v36 = vmul.f32 %v33, %v35
    %38 = vrot.lane.b32.xlu0 %v31, 2
    %v39 = vpop.permute.xlu0 %38
    %v41 = vsub.f32 %v31, %v39
    %v42 = vadd.f32 %v41, 1.0
    %44 = vrot.lane.b32.xlu0 %v42, 127
    %v45 = vpop.permute.xlu0 %44
    %v47 = vmul.f32 %v42, %v45
    %v48 = vperm.slane %v29, 0
    %49 = vset.pattern.permute.xlu0 2
    %50 = vperm.xlu0 %49, %v31
    %v51 = vpop.permute.xlu0 %50
    %v53 = vmin.f32 %v48, %v51
    %v54 = vperm.slane %v27, 0
    %55 = vset.pattern.permute.xlu0 0
    %56 = vperm.xlu0 %55, %v31
    %v57 = vpop.permute.xlu0 %56
    %v59 = vmax.f32 %v54, %v57
    %v60 = vsub.f32 %v53, %v59
    %v61 = vadd.f32 %v60, 1.0
    %v62 = vperm.slane %v30, 0
    %63 = vset.pattern.permute.xlu0 3
    %64 = vperm.xlu0 %63, %v31
    %v65 = vpop.permute.xlu0 %64
    %v67 = vmin.f32 %v62, %v65
    %v68 = vperm.slane %v28, 0
    %69 = vset.pattern.permute.xlu0 1
    %70 = vperm.xlu0 %69, %v31
    %v71 = vpop.permute.xlu0 %70
    %v73 = vmax.f32 %v68, %v71
    %v74 = vsub.f32 %v67, %v73
    %v75 = vadd.f32 %v74, 1.0
    %vm76 = vcmp.gt.f32.partialorder %v61, 0.0
    %vm77 = vcmp.gt.f32.partialorder %v75, 0.0
    %vm78 = vmand %vm76, %vm77
    %v79 = vmax.f32 %v61, 0.0
    %v80 = vmax.f32 %v75, 0.0
    %v81 = vmul.f32 %v79, %v80
    %v82 = vperm.slane %v36, 0
    %84 = vset.pattern.permute.xlu0 2
    %85 = vperm.xlu0 %84, %v47
    %v86 = vpop.permute.xlu0 %85
    %v88 = vadd.f32 %v82, %v86
    %v89 = vsub.f32 %v88, %v81
    %v90 = vrcp.pop %v89
    %v91 = vmul.f32 %v89, %v90
    %v92 = vsub.f32 1.0, %v91
    %v93 = vmul.f32 %v90, %v92
    %v94 = vadd.f32 %v90, %v93
    %vm95 = vweird.f32 %v89
    %vm96 = vweird.f32 %v90
    %vm97 = vmor %vm95, %vm96
    %v98 = vsel %vm97, %v90, %v94
    %v99 = vand.u32 2147483647, %v89
    %vm100 = vcmp.eq.f32.partialorder %v99, 8.507059e+37
    %v101 = vand.u32 %v89, 2147483648
    %v102 = vor.u32 1.1754944e-38, %v101
    %v103 = vsel %vm100, %v102, %v98
    %v104 = vmul.f32 %v81, %v103
    %v105 = vsel %vm78, %v104, 0.0
    %vm106 = vcmask 523264
    %v107 = vsel %vm106, %v105, -inf
    %v108 = vrot.slane %v107, 4
    %v109 = vmax.f32 %v107, %v108
    %v110 = vrot.slane %v109, 2
    %v111 = vmax.f32 %v109, %v110
    %v112 = vrot.slane %v111, 1
    %v113 = vmax.f32 %v111, %v112
    %v114 = vlaneseq
    %v115 = vshrl.u32 %v114, 7
    %vm116 = vcmp.ge.f32.partialorder %v105, %v113
    %v117 = vsel %vm116, %v115, 8
    %v118 = vsel %vm106, %v117, 2147483647
    %v119 = vrot.slane %v118, 4
    %vm120 = vcmp.lt.s32.totalorder %v118, %v119
    %v121 = vsel %vm120, %v118, %v119
    %v122 = vrot.slane %v121, 2
    %vm123 = vcmp.lt.s32.totalorder %v121, %v122
    %v124 = vsel %vm123, %v121, %v122
    %v125 = vrot.slane %v124, 1
    %vm126 = vcmp.lt.s32.totalorder %v124, %v125
    %v127 = vsel %vm126, %v124, %v125
    %vm128 = vcmp.eq.s32.totalorder %v115, %v127
    %v129 = vsel %vm128, 1, 0
    %v130 = vcvt.s32.f32 %v129
    %v131 = vld [vmem:[%s3] sm:$0xff]
    %v132 = vcvt.s32.f32 %v131
    %v133 = vld [vmem:[%s4] sm:$0xff]
    %135 = vset.pattern.permute.xlu0 0
    %136 = vperm.xlu0 %135, %v132
    %v137 = vpop.permute.xlu0 %136
    %v139 = vmul.f32 %v130, %v137
    %v140 = vsel %vm106, %v139, 0.0
    %v141 = vrot.slane %v140, 4
    %v142 = vadd.f32 %v140, %v141
    %v143 = vrot.slane %v142, 2
    %v144 = vadd.f32 %v142, %v143
    %v145 = vrot.slane %v144, 1
    %v146 = vadd.f32 %v144, %v145
    %148 = vset.pattern.permute.xlu0 0
    %149 = vperm.xlu0 %148, %v133
    %v150 = vpop.permute.xlu0 %149
    %v152 = vmul.f32 %v130, %v150
    %v153 = vsel %vm106, %v152, 0.0
    %v154 = vrot.slane %v153, 4
    %v155 = vadd.f32 %v153, %v154
    %v156 = vrot.slane %v155, 2
    %v157 = vadd.f32 %v155, %v156
    %v158 = vrot.slane %v157, 1
    %v159 = vadd.f32 %v157, %v158
    %vm160 = vcmp.ge.f32.partialorder %v113, 0.5
    %v161 = vsel %vm160, 1, 0
    %v162 = vcvt.s32.f32 %v161
    %vm163 = vcmp.ge.f32.partialorder %v113, 0.1
    %v164 = vsel %vm163, 1, 0
    %v165 = vcvt.s32.f32 %v164
    %v166 = vmul.f32 %v146, %v162
    %v167 = vmul.f32 %v159, %v165
    %v168 = vmul.f32 %v130, %v162
    %v169 = vsel %vm106, %v168, 0.0
    %170 = vadd.xlane.f32.xlu0 %v169
    %v171 = vpop.xlane.xlu0 %170
    %v173 = vsel %vm106, %v168, 0
    %v176 = vsel %vm106, %v25, 0
    %v179 = vsel %vm106, %v26, 0
    %181 = vmatpush.xpose.msra.mxu0 0.0
    %182 = vmatpush.xpose.msra.mxu0 0.0
    %183 = vmatpush.xpose.msra.mxu0 0.0
    %184 = vmatpush.xpose.msra.mxu0 0.0
    %185 = vmatpush.xpose.msra.mxu0 0.0
    %186 = vmatpush.xpose.msra.mxu0 0.0
    %187 = vmatpush.xpose.msra.mxu0 0.0
    %188 = vmatpush.xpose.msra.mxu0 0.0
    %189 = vmatpush.xpose.msra.mxu0 0.0
    %190 = vmatpush.xpose.msra.mxu0 0.0
    %191 = vmatpush.xpose.msra.mxu0 0.0
    %192 = vmatpush.xpose.msra.mxu0 0.0
    %193 = vmatpush.xpose.msra.mxu0 0.0
    %194 = vmatpush.xpose.msra.mxu0 0.0
    %195 = vmatpush.xpose.msra.mxu0 %v179
    %196 = vmatpush.xpose.msra.mxu0 %v176
    %197 = vmatmul.f32.gmra.mxu0 %v173
    %v198 = vpop.f32.mrf.mxu0
    %v199 = vadd.f32 0.0, %v198
    %200 = vdwg.mxu0
    %v201 = vlaneseq
    %v202 = vand.u32 %v201, 127
    %203 = vset.pattern.permute.xlu0 0
    %204 = vperm.xlu0 %203, %v131
    %v205 = vpop.permute.xlu0 %204
    %vm206 = vcmp.eq.s32.totalorder %v202, %v205
    %v207 = vsel %vm206, 1, 0
    %v208 = vcvt.s32.f32 %v207
    %v209 = vmul.f32 %v208, %v199
    %vm210 = vcmask 130048
    %v211 = vsel %vm210, %v209, 0.0
    %212 = vadd.xlane.f32.xlu0 %v211
    %v213 = vpop.xlane.xlu0 %212
    %v214 = vmax.f32 %v171, 1.0
    %v215 = vrcp.pop %v214
    %v216 = vmul.f32 %v214, %v215
    %v217 = vsub.f32 1.0, %v216
    %v218 = vmul.f32 %v215, %v217
    %v219 = vadd.f32 %v215, %v218
    %vm220 = vweird.f32 %v214
    %vm221 = vweird.f32 %v215
    %vm222 = vmor %vm220, %vm221
    %v223 = vsel %vm222, %v215, %v219
    %v224 = vand.u32 2147483647, %v214
    %vm225 = vcmp.eq.f32.partialorder %v224, 8.507059e+37
    %v226 = vand.u32 %v214, 2147483648
    %v227 = vor.u32 1.1754944e-38, %v226
    %v228 = vsel %vm225, %v227, %v223
    %v229 = vmul.f32 %v213, %v228
    %vm230 = vcmp.gt.f32.partialorder %v171, 0.0
    %v231 = vmax.f32 %v229, 1e-09
    %v232 = vlog2.pop %v231
    %v233 = vmul.f32 %v232, 0.6931472
    %v234 = vsub.f32 0.0, %v233
    %v235 = vmul.f32 %v234, %v171
    %v236 = vmul.f32 %v235, %v133
    %v237 = vsel %vm230, %v236, 0.0
    %vm238 = vcmask 7168
    %v239 = vsel %vm238, %v237, 0.0
    %240 = vadd.xlane.f32.xlu0 %v239
    %v241 = vpop.xlane.xlu0 %240
    %v242 = vrot.slane %v241, 4
    %v243 = vadd.f32 %v241, %v242
    %v244 = vrot.slane %v243, 2
    %v245 = vadd.f32 %v243, %v244
    %v246 = vrot.slane %v245, 1
    %v247 = vadd.f32 %v245, %v246
    %s248 = vtos %v247
    %v249 = vstv %s248
    %vm250 = vcmp.eq.f32.partialorder %v166, 0.0
    %v251 = vsel %vm250, %v167, 0.0
    %v252 = vlog2.pop %v25
    %v253 = vmul.f32 %v252, 0.6931472
    %v254 = vmul.f32 %v253, %v251
    %vm255 = vcmask 516096
    %v256 = vsel %vm255, %v254, 0.0
    %257 = vadd.xlane.f32.xlu0 %v256
    %v258 = vpop.xlane.xlu0 %257
    %v259 = vrot.slane %v258, 4
    %v260 = vadd.f32 %v258, %v259
    %v261 = vrot.slane %v260, 2
    %v262 = vadd.f32 %v260, %v261
    %v263 = vrot.slane %v262, 1
    %v264 = vadd.f32 %v262, %v263
    %s265 = vtos %v264
    %v266 = vstv %s265
    %v267 = vsub.f32 0.0, %v266
    %v268 = vadd.f32 %v249, %v267
    %v269 = vrcp.pop 64.0
    %v270 = vmul.f32 64.0, %v269
    %v271 = vsub.f32 1.0, %v270
    %v272 = vmul.f32 %v269, %v271
    %v273 = vadd.f32 %v269, %v272
    %vm274 = vweird.f32 %v269
    %v275 = vsel %vm274, %v269, %v273
    %v276 = vmul.f32 %v268, %v275
    %vm277 = vcmask 0
    %278 = vst.msk [vmem:[#allocation2] sm:$0x1] %vm277, %v276
    // Predicated region
    $region22: #{pcl_losses_pallas.1} parent=1 // pred_check
      _
    $region23: #{pcl_losses_pallas.1} parent=1 // pred_check_branch
      %280 = sbr.rel (0) target = $region25
    $region24: #{pcl_losses_pallas.1} parent=1 // pred_region
      %282 = vsyncadd [#allocation3], 0
      %s284 = sshll.u32 [#allocation2], 4
      %s285 = int_to_ptr.vmem [resolvable:$true] %s284
      %s286 = sshll.u32 %s5, 4
      %s287 = int_to_ptr.hbm [resolvable:$true] %s286
      %289 = dma.vmem_to_hbm [thread:$0]  %s285, 16, %s287, [#allocation3]
    $region25: #{pcl_losses_pallas.1} parent=1 // pred_fallthru
      _
    // Predicated region
    $region26: #{pcl_losses_pallas.1} parent=1 // pred_check
      _
    $region27: #{pcl_losses_pallas.1} parent=1 // pred_check_branch
      %291 = sbr.rel (0) target = $region29
    $region28: #{pcl_losses_pallas.1} parent=1 // pred_region
      %293 = dma.done [#allocation3], 16
    $region29: #{pcl_losses_pallas.1} parent=1 // pred_fallthru
      _
    %294 = vsyncpa [#allocation3], 1

</llo_original>
